<compile_context>
chip_gen: v7x
topology: tpu7x:2x2x1
jax: 0.10.0
libtpu: 0.0.40
codegen_flags: <defaults>
</compile_context>

<pallas_src>
import jax
import jax.numpy as jnp
import numpy as np
from jax.experimental import pallas as pl
from jax.experimental.pallas import tpu as pltpu

N_FFT = 128                     # frame length
HOP = N_FFT // 2                # 50% overlap
N_BINS = N_FFT // 2 + 1         # 65 one-sided frequency bins
LANES = 128                     # TPU lane width
TILE_H_MAX = 2048               # hop rows (== frames) per grid step
VMEM_LIMIT = 32 * 1024 * 1024


def _round_up(x, m):
    return ((x + m - 1) // m) * m


def _num_tensorcores():
    """2 only on multi-TensorCore chips (v7x); 1 on single-TC v5e/v6e."""
    try:
        kind = jax.devices()[0].device_kind.lower()
        return 2 if "v7" in kind else 1
    except Exception:
        return 1


def _packed_dft_basis():
    """Windowed one-sided DFT packed into (128,128), split top/bottom (bf16).

    Lanes 0..64  : real part of bins 0..64
    Lanes 65..127: imag part of bins 1..63 (imag of bins 0/64 is exactly 0)
    Row t carries window[t]; rows 0..63 multiply the first half of a frame,
    rows 64..127 the second half.
    """
    n = np.arange(N_FFT, dtype=np.float64)
    window = 0.5 - 0.5 * np.cos(2.0 * np.pi * n / N_FFT)   # periodic Hann (torch default)
    k = n[:, None]
    f = np.arange(N_BINS, dtype=np.float64)[None, :]
    ang = 2.0 * np.pi * k * f / N_FFT
    re = np.cos(ang) * window[:, None]
    im = np.sin(ang) * window[:, None]                     # sign irrelevant (squared)
    basis = np.zeros((N_FFT, LANES), np.float32)
    basis[:, :N_BINS] = re
    basis[:, N_BINS:] = im[:, 1:N_BINS - 1]                # im bins 1..63 -> lanes 65..127
    return (jnp.asarray(basis[:HOP], jnp.bfloat16),
            jnp.asarray(basis[HOP:], jnp.bfloat16))


def l1_freq_kernel(xo_ref, xt_ref, xo_halo_ref, xt_halo_ref,
                   bt_ref, bb_ref, mask_ref, out_ref):
    i = pl.program_id(1)

    @pl.when(i == 0)
    def _init():
        out_ref[...] = jnp.zeros_like(out_ref)

    tile_h = xo_ref.shape[0]
    b_top = bt_ref[...]                                     # (64, 128) bf16
    b_bot = bb_ref[...]                                     # (64, 128) bf16

    # (1,128) per-step lane constants (a handful of VPU ops, negligible).
    lane = jax.lax.broadcasted_iota(jnp.int32, (1, LANES), 1)
    roll_ok = jnp.logical_and(lane >= 1, lane <= N_BINS - 2).astype(jnp.float32)
    lane_ok = lane <= N_BINS - 1

    def magnitude(x_ref, halo_ref):
        rows = x_ref[...]                                   # hop rows r0 .. r0+tile_h-1
        halo = halo_ref[7:8, :]                             # hop row r0-1 (dummy if r0==0; masked)
        prev = jnp.concatenate([halo, rows[:tile_h - 1, :]], axis=0)
        # frame f = r0-1+j  =  [prev[j] | rows[j]]  ->  packed windowed DFT (bf16 MXU, f32 acc)
        y = (jnp.dot(prev.astype(jnp.bfloat16), b_top,
                     preferred_element_type=jnp.float32) +
             jnp.dot(rows.astype(jnp.bfloat16), b_bot,
                     preferred_element_type=jnp.float32))
        y2 = y * y
        # lane 64+k holds im_k^2 (k=1..63); a 64-lane roll aligns it with re_k^2.
        m2 = y2 + jnp.roll(y2, shift=LANES // 2, axis=1) * roll_ok
        return jnp.sqrt(m2)

    diff = jnp.abs(magnitude(xo_ref, xo_halo_ref) - magnitude(xt_ref, xt_halo_ref))
    keep = jnp.logical_and(mask_ref[...] > 0.5, lane_ok)    # (tile_h,1) & (1,128)
    diff = jnp.where(keep, diff, 0.0)                       # nan-safe for OOB/invalid rows

    # vreg-shaped accumulation straight into the resident output block.
    out_ref[...] += jnp.sum(diff.reshape(tile_h // 8, 8, LANES), axis=0)


def l1_freq_loss(outputs, target):
    # TODO(synk): `transforms.stft` in the PyTorch source is unspecified; we
    # implement a standard one-sided STFT (n_fft=128, hop=64, periodic Hann,
    # center=False) and take the complex magnitude.
    # TODO(synk): forward only — wrap in jax.custom_vjp before using with jax.grad.
    assert outputs.shape == target.shape and outputs.ndim == 2
    B, T = outputs.shape
    q = T // HOP                    # hop rows per batch element
    n_frames = q - 1                # frames per batch element (center=False)
    assert n_frames >= 1, "signal too short for a single STFT frame"
    R = B * q                       # total hop rows

    # Free hop-reshape only: no frame duplication, no concat, no pad.
    xo = outputs[:, : q * HOP].astype(jnp.float32).reshape(R, HOP)
    xt = target[:, : q * HOP].astype(jnp.float32).reshape(R, HOP)

    num_cores = _num_tensorcores()
    per_core = -(-R // num_cores)
    tile_h = max(8, min(TILE_H_MAX, _round_up(per_core, 8)))
    n_inner = -(-per_core // tile_h)
    if num_cores > 1 and (num_cores * n_inner - 1) * tile_h >= R:
        # would create fully out-of-range blocks -> fall back to a single core
        num_cores = 1
        tile_h = max(8, min(TILE_H_MAX, _round_up(R, 8)))
        n_inner = -(-R // tile_h)
    r_pad = num_cores * n_inner * tile_h

    # Frame-validity mask, one row per hop row r (frame f = r-1):
    # valid <=> r % q != 0 (f >= 0 and not a cross-batch frame) and r < R.
    r_idx = np.arange(r_pad)
    frame_mask = jnp.asarray(
        ((r_idx % q != 0) & (r_idx < R)).astype(np.float32)[:, None])

    basis_top, basis_bot = _packed_dft_basis()

    row_spec = pl.BlockSpec((tile_h, HOP), lambda c, i: (c * n_inner + i, 0))
    halo_spec = pl.BlockSpec(
        (8, HOP),
        lambda c, i: (jnp.maximum((c * n_inner + i) * (tile_h // 8) - 1, 0), 0))
    basis_spec = pl.BlockSpec((HOP, LANES), lambda c, i: (0, 0))
    mask_spec = pl.BlockSpec((tile_h, 1), lambda c, i: (c * n_inner + i, 0))

    partials = pl.pallas_call(
        l1_freq_kernel,
        out_shape=jax.ShapeDtypeStruct((num_cores * 8, LANES), jnp.float32),
        grid_spec=pltpu.PrefetchScalarGridSpec(
            num_scalar_prefetch=0,
            grid=(num_cores, n_inner),
            in_specs=[row_spec, row_spec, halo_spec, halo_spec,
                      basis_spec, basis_spec, mask_spec],
            out_specs=pl.BlockSpec((8, LANES), lambda c, i: (c, 0)),
        ),
        compiler_params=pltpu.CompilerParams(
            dimension_semantics=("parallel", "arbitrary"),
            vmem_limit_bytes=VMEM_LIMIT),
    )(xo, xt, xo, xt, basis_top, basis_bot, frame_mask)

    # Mean over the true (unpadded) flattened STFT element count.
    n_elems = B * n_frames * N_BINS
    return jnp.sum(partials) / jnp.float32(n_elems)


if __name__ == "__main__":
    key = jax.random.PRNGKey(0)
    k1, k2 = jax.random.split(key)
    B, T = 2, 1024
    outputs = jax.random.normal(k1, (B, T), dtype=jnp.float32)
    target = jax.random.normal(k2, (B, T), dtype=jnp.float32)

    loss = jax.jit(l1_freq_loss)(outputs, target)
    jax.block_until_ready(loss)
    print("KERNEL_OK")
</pallas_src>

<mosaic_0001>
module attributes {stable_mosaic.version = 11 : i64} {
  func.func @l1_freq_kernel(%arg0: i32, %arg1: i32, %arg2: memref<32x64xf32, #tpu.memory_space<vmem>>, %arg3: memref<32x64xf32, #tpu.memory_space<vmem>>, %arg4: memref<8x64xf32, #tpu.memory_space<vmem>>, %arg5: memref<8x64xf32, #tpu.memory_space<vmem>>, %arg6: memref<64x128xbf16, #tpu.memory_space<vmem>>, %arg7: memref<64x128xbf16, #tpu.memory_space<vmem>>, %arg8: memref<32x1xf32, #tpu.memory_space<vmem>>, %arg9: memref<8x128xf32, #tpu.memory_space<vmem>>) attributes {dimension_semantics = [#tpu.dimension_semantics<parallel>, #tpu.dimension_semantics<arbitrary>], iteration_bounds = array<i64: 1, 1>, scalar_prefetch = 0 : i64, scratch_operands = 0 : i64, tpu.core_type = #tpu.core_type<tc>, window_params = [{transform_indices = @transform_0, window_bounds = array<i64: 32, 64>}, {transform_indices = @transform_1, window_bounds = array<i64: 32, 64>}, {transform_indices = @transform_2, window_bounds = array<i64: 8, 64>}, {transform_indices = @transform_3, window_bounds = array<i64: 8, 64>}, {pipeline_mode = #tpu.pipeline_mode<synchronous>, transform_indices = @transform_4, window_bounds = array<i64: 64, 128>}, {pipeline_mode = #tpu.pipeline_mode<synchronous>, transform_indices = @transform_5, window_bounds = array<i64: 64, 128>}, {transform_indices = @transform_6, window_bounds = array<i64: 32, 1>}, {transform_indices = @transform_7, window_bounds = array<i64: 8, 128>}]} {
    %c0_i32 = arith.constant 0 : i32
    %0 = arith.cmpi eq, %arg1, %c0_i32 : i32
    %1 = arith.extui %0 : i1 to i32
    %c0_i32_0 = arith.constant 0 : i32
    %2 = arith.cmpi ne, %1, %c0_i32_0 : i32
    scf.if %2 {
      %cst_23 = arith.constant 0.000000e+00 : f32
      %64 = vector.broadcast %cst_23 : f32 to vector<8x128xf32>
      %c0_24 = arith.constant 0 : index
      %c0_25 = arith.constant 0 : index
      %65 = vector.load %arg9[%c0_24, %c0_25] : memref<8x128xf32, #tpu.memory_space<vmem>>, vector<8x128xf32>
      tpu.vector_store %arg9[%c0_24, %c0_25], %64 {strides = array<i32>} : memref<8x128xf32, #tpu.memory_space<vmem>>, vector<8x128xf32>,
    } else {
    }
    %c0 = arith.constant 0 : index
    %c0_1 = arith.constant 0 : index
    %3 = vector.load %arg6[%c0, %c0_1] : memref<64x128xbf16, #tpu.memory_space<vmem>>, vector<64x128xbf16>
    %c0_2 = arith.constant 0 : index
    %c0_3 = arith.constant 0 : index
    %4 = vector.load %arg7[%c0_2, %c0_3] : memref<64x128xbf16, #tpu.memory_space<vmem>>, vector<64x128xbf16>
    %5 = tpu.iota {dimensions = array<i32: 1>} : vector<1x128xi32>
    %c1_i32 = arith.constant 1 : i32
    %6 = vector.broadcast %c1_i32 : i32 to vector<1x128xi32>
    %7 = arith.cmpi sge, %5, %6 : vector<1x128xi32>
    %c63_i32 = arith.constant 63 : i32
    %8 = vector.broadcast %c63_i32 : i32 to vector<1x128xi32>
    %9 = arith.cmpi sle, %5, %8 : vector<1x128xi32>
    %10 = arith.andi %7, %9 : vector<1x128xi1>
    %11 = arith.extui %10 : vector<1x128xi1> to vector<1x128xi32>
    %12 = arith.sitofp %11 : vector<1x128xi32> to vector<1x128xf32>
    %c64_i32 = arith.constant 64 : i32
    %13 = vector.broadcast %c64_i32 : i32 to vector<1x128xi32>
    %14 = arith.cmpi sle, %5, %13 : vector<1x128xi32>
    %c0_4 = arith.constant 0 : index
    %c0_5 = arith.constant 0 : index
    %15 = vector.load %arg2[%c0_4, %c0_5] : memref<32x64xf32, #tpu.memory_space<vmem>>, vector<32x64xf32>
    %c7 = arith.constant 7 : index
    %c0_6 = arith.constant 0 : index
    %16 = vector.load %arg4[%c7, %c0_6] : memref<8x64xf32, #tpu.memory_space<vmem>>, vector<1x64xf32>
    %17 = vector.extract_strided_slice %15 {offsets = [0, 0], sizes = [31, 64], strides = [1, 1]} : vector<32x64xf32> to vector<31x64xf32>
    %18 = tpu.concatenate %16, %17 in 0 : vector<1x64xf32>, vector<31x64xf32> -> vector<32x64xf32>
    %19 = arith.truncf %18 : vector<32x64xf32> to vector<32x64xbf16>
    %cst = arith.constant dense<0.000000e+00> : vector<32x128xf32>
    %20 = tpu.matmul %19, %3, %cst {dimension_numbers = #tpu.dot_dimension_numbers<[1], [0], [0], [1], [0, 0, 1, 1], [], []>} : vector<32x64xbf16>, vector<64x128xbf16>, vector<32x128xf32> -> vector<32x128xf32>
    %21 = arith.truncf %15 : vector<32x64xf32> to vector<32x64xbf16>
    %cst_7 = arith.constant dense<0.000000e+00> : vector<32x128xf32>
    %22 = tpu.matmul %21, %4, %cst_7 {dimension_numbers = #tpu.dot_dimension_numbers<[1], [0], [0], [1], [0, 0, 1, 1], [], []>} : vector<32x64xbf16>, vector<64x128xbf16>, vector<32x128xf32> -> vector<32x128xf32>
    %23 = arith.addf %20, %22 : vector<32x128xf32>
    %24 = arith.mulf %23, %23 : vector<32x128xf32>
    %25 = vector.extract_strided_slice %24 {offsets = [0, 64], sizes = [32, 64], strides = [1, 1]} : vector<32x128xf32> to vector<32x64xf32>
    %26 = vector.extract_strided_slice %24 {offsets = [0, 0], sizes = [32, 64], strides = [1, 1]} : vector<32x128xf32> to vector<32x64xf32>
    %27 = tpu.concatenate %25, %26 in 1 : vector<32x64xf32>, vector<32x64xf32> -> vector<32x128xf32>
    %28 = vector.broadcast %12 : vector<1x128xf32> to vector<32x128xf32>
    %29 = arith.mulf %27, %28 : vector<32x128xf32>
    %30 = arith.addf %24, %29 : vector<32x128xf32>
    %31 = math.sqrt %30 : vector<32x128xf32>
    %c0_8 = arith.constant 0 : index
    %c0_9 = arith.constant 0 : index
    %32 = vector.load %arg3[%c0_8, %c0_9] : memref<32x64xf32, #tpu.memory_space<vmem>>, vector<32x64xf32>
    %c7_10 = arith.constant 7 : index
    %c0_11 = arith.constant 0 : index
    %33 = vector.load %arg5[%c7_10, %c0_11] : memref<8x64xf32, #tpu.memory_space<vmem>>, vector<1x64xf32>
    %34 = vector.extract_strided_slice %32 {offsets = [0, 0], sizes = [31, 64], strides = [1, 1]} : vector<32x64xf32> to vector<31x64xf32>
    %35 = tpu.concatenate %33, %34 in 0 : vector<1x64xf32>, vector<31x64xf32> -> vector<32x64xf32>
    %36 = arith.truncf %35 : vector<32x64xf32> to vector<32x64xbf16>
    %cst_12 = arith.constant dense<0.000000e+00> : vector<32x128xf32>
    %37 = tpu.matmul %36, %3, %cst_12 {dimension_numbers = #tpu.dot_dimension_numbers<[1], [0], [0], [1], [0, 0, 1, 1], [], []>} : vector<32x64xbf16>, vector<64x128xbf16>, vector<32x128xf32> -> vector<32x128xf32>
    %38 = arith.truncf %32 : vector<32x64xf32> to vector<32x64xbf16>
    %cst_13 = arith.constant dense<0.000000e+00> : vector<32x128xf32>
    %39 = tpu.matmul %38, %4, %cst_13 {dimension_numbers = #tpu.dot_dimension_numbers<[1], [0], [0], [1], [0, 0, 1, 1], [], []>} : vector<32x64xbf16>, vector<64x128xbf16>, vector<32x128xf32> -> vector<32x128xf32>
    %40 = arith.addf %37, %39 : vector<32x128xf32>
    %41 = arith.mulf %40, %40 : vector<32x128xf32>
    %42 = vector.extract_strided_slice %41 {offsets = [0, 64], sizes = [32, 64], strides = [1, 1]} : vector<32x128xf32> to vector<32x64xf32>
    %43 = vector.extract_strided_slice %41 {offsets = [0, 0], sizes = [32, 64], strides = [1, 1]} : vector<32x128xf32> to vector<32x64xf32>
    %44 = tpu.concatenate %42, %43 in 1 : vector<32x64xf32>, vector<32x64xf32> -> vector<32x128xf32>
    %45 = vector.broadcast %12 : vector<1x128xf32> to vector<32x128xf32>
    %46 = arith.mulf %44, %45 : vector<32x128xf32>
    %47 = arith.addf %41, %46 : vector<32x128xf32>
    %48 = math.sqrt %47 : vector<32x128xf32>
    %49 = arith.subf %31, %48 : vector<32x128xf32>
    %50 = math.absf %49 : vector<32x128xf32>
    %c0_14 = arith.constant 0 : index
    %c0_15 = arith.constant 0 : index
    %51 = vector.load %arg8[%c0_14, %c0_15] : memref<32x1xf32, #tpu.memory_space<vmem>>, vector<32x1xf32>
    %cst_16 = arith.constant 5.000000e-01 : f32
    %52 = vector.broadcast %cst_16 : f32 to vector<32x1xf32>
    %53 = arith.cmpf ogt, %51, %52 : vector<32x1xf32>
    %54 = vector.broadcast %53 : vector<32x1xi1> to vector<32x128xi1>
    %55 = vector.broadcast %14 : vector<1x128xi1> to vector<32x128xi1>
    %56 = arith.andi %54, %55 : vector<32x128xi1>
    %cst_17 = arith.constant 0.000000e+00 : f32
    %57 = vector.broadcast %cst_17 : f32 to vector<32x128xf32>
    %58 = arith.select %56, %50, %57 : vector<32x128xi1>, vector<32x128xf32>
    %c0_18 = arith.constant 0 : index
    %c0_19 = arith.constant 0 : index
    %59 = vector.load %arg9[%c0_18, %c0_19] : memref<8x128xf32, #tpu.memory_space<vmem>>, vector<8x128xf32>
    %60 = vector.shape_cast %58 : vector<32x128xf32> to vector<4x8x128xf32>
    %cst_20 = arith.constant dense<0.000000e+00> : vector<8x128xf32>
    %61 = vector.multi_reduction <add>, %60, %cst_20 [0] : vector<4x8x128xf32> to vector<8x128xf32>
    %62 = arith.addf %59, %61 : vector<8x128xf32>
    %c0_21 = arith.constant 0 : index
    %c0_22 = arith.constant 0 : index
    %63 = vector.load %arg9[%c0_21, %c0_22] : memref<8x128xf32, #tpu.memory_space<vmem>>, vector<8x128xf32>
    tpu.vector_store %arg9[%c0_21, %c0_22], %62 {strides = array<i32>} : memref<8x128xf32, #tpu.memory_space<vmem>>, vector<8x128xf32>,
    return
  }
  func.func @transform_0(%arg0: i32, %arg1: i32) -> (i32, i32) {
    %c1_i32 = arith.constant 1 : i32
    %0 = arith.muli %arg0, %c1_i32 : i32
    %1 = arith.addi %0, %arg1 : i32
    %c0_i32 = arith.constant 0 : i32
    %c0_i32_0 = arith.constant 0 : i32
    return %1, %c0_i32 : i32, i32
  }
  func.func @transform_1(%arg0: i32, %arg1: i32) -> (i32, i32) {
    %c1_i32 = arith.constant 1 : i32
    %0 = arith.muli %arg0, %c1_i32 : i32
    %1 = arith.addi %0, %arg1 : i32
    %c0_i32 = arith.constant 0 : i32
    %c0_i32_0 = arith.constant 0 : i32
    return %1, %c0_i32 : i32, i32
  }
  func.func @transform_2(%arg0: i32, %arg1: i32) -> (i32, i32) {
    %c1_i32 = arith.constant 1 : i32
    %0 = arith.muli %arg0, %c1_i32 : i32
    %1 = arith.addi %0, %arg1 : i32
    %c4_i32 = arith.constant 4 : i32
    %2 = arith.muli %1, %c4_i32 : i32
    %c1_i32_0 = arith.constant 1 : i32
    %3 = arith.subi %2, %c1_i32_0 : i32
    %c0_i32 = arith.constant 0 : i32
    %4 = arith.maxsi %3, %c0_i32 : i32
    %c0_i32_1 = arith.constant 0 : i32
    %c0_i32_2 = arith.constant 0 : i32
    return %4, %c0_i32_1 : i32, i32
  }
  func.func @transform_3(%arg0: i32, %arg1: i32) -> (i32, i32) {
    %c1_i32 = arith.constant 1 : i32
    %0 = arith.muli %arg0, %c1_i32 : i32
    %1 = arith.addi %0, %arg1 : i32
    %c4_i32 = arith.constant 4 : i32
    %2 = arith.muli %1, %c4_i32 : i32
    %c1_i32_0 = arith.constant 1 : i32
    %3 = arith.subi %2, %c1_i32_0 : i32
    %c0_i32 = arith.constant 0 : i32
    %4 = arith.maxsi %3, %c0_i32 : i32
    %c0_i32_1 = arith.constant 0 : i32
    %c0_i32_2 = arith.constant 0 : i32
    return %4, %c0_i32_1 : i32, i32
  }
  func.func @transform_4(%arg0: i32, %arg1: i32) -> (i32, i32) {
    %c0_i32 = arith.constant 0 : i32
    %c0_i32_0 = arith.constant 0 : i32
    %c0_i32_1 = arith.constant 0 : i32
    return %c0_i32, %c0_i32_0 : i32, i32
  }
  func.func @transform_5(%arg0: i32, %arg1: i32) -> (i32, i32) {
    %c0_i32 = arith.constant 0 : i32
    %c0_i32_0 = arith.constant 0 : i32
    %c0_i32_1 = arith.constant 0 : i32
    return %c0_i32, %c0_i32_0 : i32, i32
  }
  func.func @transform_6(%arg0: i32, %arg1: i32) -> (i32, i32) {
    %c1_i32 = arith.constant 1 : i32
    %0 = arith.muli %arg0, %c1_i32 : i32
    %1 = arith.addi %0, %arg1 : i32
    %c0_i32 = arith.constant 0 : i32
    %c0_i32_0 = arith.constant 0 : i32
    return %1, %c0_i32 : i32, i32
  }
  func.func @transform_7(%arg0: i32, %arg1: i32) -> (i32, i32) {
    %c0_i32 = arith.constant 0 : i32
    %c0_i32_0 = arith.constant 0 : i32
    return %arg0, %c0_i32 : i32, i32
  }
}

</mosaic_0001>

<llo_original>
// kernel: l1_freq_loss.1
$region0: #{l1_freq_loss.1}
  #allocation0 [shape = 'u32[]', space=smem, size = 0x4, offset = 0x4, fixed_abs, tag = 'smem constant byte address 0x4 - core index']
  #allocation1 [shape = 'u32[144,128]{1,0:T(1,128)}', space=vmem, size = 0x12000, scoped, tag = 'internal scratch']
  %s0 = inlined_call_operand.vmem [shape: f32[32,64], index: 0, kind: input, shape index: {}, may-alias: {0,2}]
  %s1 = inlined_call_operand.vmem [shape: f32[32,64], index: 1, kind: input, shape index: {}, may-alias: {1,3}]
  %s2 = inlined_call_operand.vmem [shape: f32[32,64], index: 2, kind: input, shape index: {}, may-alias: {0,2}]
  %s3 = inlined_call_operand.vmem [shape: f32[32,64], index: 3, kind: input, shape index: {}, may-alias: {1,3}]
  %s4 = inlined_call_operand.vmem [shape: bf16[64,128], index: 4, kind: input, shape index: {}]
  %s5 = inlined_call_operand.vmem [shape: bf16[64,128], index: 5, kind: input, shape index: {}]
  %s6 = inlined_call_operand.vmem [shape: f32[32,1], index: 6, kind: input, shape index: {}]
  %s7 = inlined_call_operand.vmem [shape: f32[8,128], index: 7, kind: output, shape index: {}]
  %s8 = sld [smem:[#allocation0]]
  $region42: #{l1_freq_loss.1} parent=0
    _
  %s10 = ssub.s32 1, %s8
  %s11 = scalar_select 0, %s10, %s8
  // Predicated region
  $region2: #{l1_freq_loss.1} parent=0 // pred_check
    _
  $region3: #{l1_freq_loss.1} parent=0 // pred_check_branch
    %13 = sbr.rel (0) target = $region5
  $region4: #{l1_freq_loss.1} parent=0 // pred_region
    %s14 = sadd.s32 0, 0
    %s15 = smul.u32 4, %s14
    %p16 = scmp.lt.s32.totalorder %s15, 3
    %s17 = scalar_select %p16, %s15, 3
    %s18 = smul.addr %s17, 8
    %s19 = scalar_lea.vmem %s0, %s18
    %s20 = sadd.s32 0, 0
    %s21 = smul.u32 4, %s20
  $region5: #{l1_freq_loss.1} parent=0 // pred_fallthru
    _
  // Predicated region
  $region6: #{l1_freq_loss.1} parent=0 // pred_check
    _
  $region7: #{l1_freq_loss.1} parent=0 // pred_check_branch
    %23 = sbr.rel (0) target = $region9
  $region8: #{l1_freq_loss.1} parent=0 // pred_region
    %s24 = sadd.s32 0, 0
    %s25 = smul.u32 4, %s24
    %p26 = scmp.lt.s32.totalorder %s25, 3
    %s27 = scalar_select %p26, %s25, 3
    %s28 = smul.addr %s27, 8
    %s29 = scalar_lea.vmem %s1, %s28
    %s30 = sadd.s32 0, 0
    %s31 = smul.u32 4, %s30
  $region9: #{l1_freq_loss.1} parent=0 // pred_fallthru
    _
  // Predicated region
  $region10: #{l1_freq_loss.1} parent=0 // pred_check
    _
  $region11: #{l1_freq_loss.1} parent=0 // pred_check_branch
    %33 = sbr.rel (0) target = $region13
  $region12: #{l1_freq_loss.1} parent=0 // pred_region
    %s34 = sadd.s32 0, 0
    %s35 = smul.u32 %s34, 4
    %s36 = ssub.s32 %s35, 1
    %p37 = scmp.gt.s32.totalorder %s36, 0
    %s38 = scalar_select %p37, %s36, 0
    %p39 = scmp.lt.s32.totalorder %s38, 3
    %s40 = scalar_select %p39, %s38, 3
    %s41 = smul.addr %s40, 8
    %s42 = scalar_lea.vmem %s2, %s41
    %s43 = sadd.s32 0, 0
    %s44 = smul.u32 %s43, 4
    %s45 = ssub.s32 %s44, 1
    %p46 = scmp.gt.s32.totalorder %s45, 0
    %s47 = scalar_select %p46, %s45, 0
  $region13: #{l1_freq_loss.1} parent=0 // pred_fallthru
    _
  // Predicated region
  $region14: #{l1_freq_loss.1} parent=0 // pred_check
    _
  $region15: #{l1_freq_loss.1} parent=0 // pred_check_branch
    %49 = sbr.rel (0) target = $region17
  $region16: #{l1_freq_loss.1} parent=0 // pred_region
    %s50 = sadd.s32 0, 0
    %s51 = smul.u32 %s50, 4
    %s52 = ssub.s32 %s51, 1
    %p53 = scmp.gt.s32.totalorder %s52, 0
    %s54 = scalar_select %p53, %s52, 0
    %p55 = scmp.lt.s32.totalorder %s54, 3
    %s56 = scalar_select %p55, %s54, 3
    %s57 = smul.addr %s56, 8
    %s58 = scalar_lea.vmem %s3, %s57
    %s59 = sadd.s32 0, 0
    %s60 = smul.u32 %s59, 4
    %s61 = ssub.s32 %s60, 1
    %p62 = scmp.gt.s32.totalorder %s61, 0
    %s63 = scalar_select %p62, %s61, 0
  $region17: #{l1_freq_loss.1} parent=0 // pred_fallthru
    _
  // Predicated region
  $region18: #{l1_freq_loss.1} parent=0 // pred_check
    _
  $region19: #{l1_freq_loss.1} parent=0 // pred_check_branch
    %65 = sbr.rel (0) target = $region21
  $region20: #{l1_freq_loss.1} parent=0 // pred_region
    _
  $region21: #{l1_freq_loss.1} parent=0 // pred_fallthru
    _
  // Predicated region
  $region22: #{l1_freq_loss.1} parent=0 // pred_check
    _
  $region23: #{l1_freq_loss.1} parent=0 // pred_check_branch
    %67 = sbr.rel (0) target = $region25
  $region24: #{l1_freq_loss.1} parent=0 // pred_region
    _
  $region25: #{l1_freq_loss.1} parent=0 // pred_fallthru
    _
  // Predicated region
  $region26: #{l1_freq_loss.1} parent=0 // pred_check
    _
  $region27: #{l1_freq_loss.1} parent=0 // pred_check_branch
    %69 = sbr.rel (0) target = $region29
  $region28: #{l1_freq_loss.1} parent=0 // pred_region
    %s70 = sadd.s32 0, 0
    %s71 = smul.u32 4, %s70
    %p72 = scmp.lt.s32.totalorder %s71, 3
    %s73 = scalar_select %p72, %s71, 3
    %s74 = smul.addr %s73, 8
    %s75 = scalar_lea.vmem %s6, %s74
    %s76 = sadd.s32 0, 0
    %s77 = smul.u32 4, %s76
  $region29: #{l1_freq_loss.1} parent=0 // pred_fallthru
    _
  %s78 = sadd.s32 0, 0
  %s79 = smul.u32 4, %s78
  %p80 = scmp.lt.s32.totalorder %s79, 3
  %s81 = scalar_select %p80, %s79, 3
  %s82 = smul.addr %s81, 8
  %s83 = scalar_lea.vmem %s0, %s82
  %s84 = sadd.s32 0, 0
  %s85 = smul.u32 4, %s84
  %p86 = scmp.lt.s32.totalorder %s85, 3
  %s87 = scalar_select %p86, %s85, 3
  %s88 = smul.addr %s87, 8
  %s89 = scalar_lea.vmem %s1, %s88
  %s90 = sadd.s32 0, 0
  %s91 = smul.u32 %s90, 4
  %s92 = ssub.s32 %s91, 1
  %p93 = scmp.gt.s32.totalorder %s92, 0
  %s94 = scalar_select %p93, %s92, 0
  %p95 = scmp.lt.s32.totalorder %s94, 3
  %s96 = scalar_select %p95, %s94, 3
  %s97 = smul.addr %s96, 8
  %s98 = scalar_lea.vmem %s2, %s97
  %s99 = sadd.s32 0, 0
  %s100 = smul.u32 %s99, 4
  %s101 = ssub.s32 %s100, 1
  %p102 = scmp.gt.s32.totalorder %s101, 0
  %s103 = scalar_select %p102, %s101, 0
  %p104 = scmp.lt.s32.totalorder %s103, 3
  %s105 = scalar_select %p104, %s103, 3
  %s106 = smul.addr %s105, 8
  %s107 = scalar_lea.vmem %s3, %s106
  %s108 = sadd.s32 0, 0
  %s109 = smul.u32 4, %s108
  %p110 = scmp.lt.s32.totalorder %s109, 3
  %s111 = scalar_select %p110, %s109, 3
  %s112 = smul.addr %s111, 8
  %s113 = scalar_lea.vmem %s6, %s112
  %s114 = sadd.s32 0, 0
  %s115 = smul.u32 4, %s114
  %p116 = scmp.lt.s32.totalorder %s115, 3
  %s117 = scalar_select %p116, %s115, 3
  %s118 = smul.addr %s117, 8
  %s119 = scalar_lea.vmem %s0, %s118
  %s120 = sadd.s32 0, 0
  %s121 = smul.u32 4, %s120
  %s122 = sadd.s32 0, 0
  %s123 = smul.u32 4, %s122
  %p124 = scmp.lt.s32.totalorder %s123, 3
  %s125 = scalar_select %p124, %s123, 3
  %s126 = smul.addr %s125, 8
  %s127 = scalar_lea.vmem %s1, %s126
  %s128 = sadd.s32 0, 0
  %s129 = smul.u32 4, %s128
  %s130 = sadd.s32 0, 0
  %s131 = smul.u32 %s130, 4
  %s132 = ssub.s32 %s131, 1
  %p133 = scmp.gt.s32.totalorder %s132, 0
  %s134 = scalar_select %p133, %s132, 0
  %p135 = scmp.lt.s32.totalorder %s134, 3
  %s136 = scalar_select %p135, %s134, 3
  %s137 = smul.addr %s136, 8
  %s138 = scalar_lea.vmem %s2, %s137
  %s139 = sadd.s32 0, 0
  %s140 = smul.u32 %s139, 4
  %s141 = ssub.s32 %s140, 1
  %p142 = scmp.gt.s32.totalorder %s141, 0
  %s143 = scalar_select %p142, %s141, 0
  %s144 = sadd.s32 0, 0
  %s145 = smul.u32 %s144, 4
  %s146 = ssub.s32 %s145, 1
  %p147 = scmp.gt.s32.totalorder %s146, 0
  %s148 = scalar_select %p147, %s146, 0
  %p149 = scmp.lt.s32.totalorder %s148, 3
  %s150 = scalar_select %p149, %s148, 3
  %s151 = smul.addr %s150, 8
  %s152 = scalar_lea.vmem %s3, %s151
  %s153 = sadd.s32 0, 0
  %s154 = smul.u32 %s153, 4
  %s155 = ssub.s32 %s154, 1
  %p156 = scmp.gt.s32.totalorder %s155, 0
  %s157 = scalar_select %p156, %s155, 0
  %s158 = sadd.s32 0, 0
  %s159 = smul.u32 4, %s158
  %p160 = scmp.lt.s32.totalorder %s159, 3
  %s161 = scalar_select %p160, %s159, 3
  %s162 = smul.addr %s161, 8
  %s163 = scalar_lea.vmem %s6, %s162
  %s164 = sadd.s32 0, 0
  %s165 = smul.u32 4, %s164
  %p167 = scmp.eq.s32.totalorder 0, 0
  // Predicated region
  $region30: #{l1_freq_loss.1} parent=0 // pred_check
    %p168 = pneg %p167
  $region31: #{l1_freq_loss.1} parent=0 // pred_check_branch
    %170 = sbr.rel (%p168) target = $region33
  $region32: #{l1_freq_loss.1} parent=0 // pred_region
    %171 = vst [vmem:[%s7] sm:$0xff] 0.0
  $region33: #{l1_freq_loss.1} parent=0 // pred_fallthru
    _
  %v172 = vld [vmem:[%s4] sm:$0xf]
  %v173 = vld [vmem:[%s4 + $0x4] sm:$0xf]
  %v174 = vld [vmem:[%s4 + $0x8] sm:$0xf]
  %v175 = vld [vmem:[%s4 + $0xc] sm:$0xf]
  %v176 = vld [vmem:[%s4 + $0x10] sm:$0xf]
  %v177 = vld [vmem:[%s4 + $0x14] sm:$0xf]
  %v178 = vld [vmem:[%s4 + $0x18] sm:$0xf]
  %v179 = vld [vmem:[%s4 + $0x1c] sm:$0xf]
  %v180 = vld [vmem:[%s5] sm:$0xf]
  %v181 = vld [vmem:[%s5 + $0x4] sm:$0xf]
  %v182 = vld [vmem:[%s5 + $0x8] sm:$0xf]
  %v183 = vld [vmem:[%s5 + $0xc] sm:$0xf]
  %v184 = vld [vmem:[%s5 + $0x10] sm:$0xf]
  %v185 = vld [vmem:[%s5 + $0x14] sm:$0xf]
  %v186 = vld [vmem:[%s5 + $0x18] sm:$0xf]
  %v187 = vld [vmem:[%s5 + $0x1c] sm:$0xf]
  %v188 = vlaneseq
  %v189 = vand.u32 %v188, 127
  %vm190 = vcmp.ge.s32.totalorder %v189, 1
  %vm191 = vcmp.le.s32.totalorder %v189, 63
  %vm192 = vmand %vm190, %vm191
  %v193 = vsel %vm192, 1, 0
  %v194 = vcvt.s32.f32 %v193
  %vm195 = vcmp.le.s32.totalorder %v189, 64
  %v196 = vld [vmem:[%s119] sm:$0xff]
  %v197 = vld [vmem:[%s119 + $0x8] sm:$0xff]
  %v198 = vld [vmem:[%s119 + $0x10] sm:$0xff]
  %v199 = vld [vmem:[%s119 + $0x18] sm:$0xff]
  %v200 = vld [vmem:[%s138 + $0x7] sm:$0x1]
  %vm205 = vcmask 1040384
  %v206 = vrot.slane %v196, 7
  %v207 = vrot.slane %v197, 7
  %v208 = vsel %vm205, %v206, %v207
  %v209 = vrot.slane %v198, 7
  %v210 = vsel %vm205, %v207, %v209
  %v211 = vrot.slane %v199, 7
  %v212 = vsel %vm205, %v209, %v211
  %v217 = vsel %vm205, %v200, %v206
  %v218 = vpack.c.bf16 %v208, %v217
  %v219 = vpack.c.bf16 %v212, %v210
  %v220 = vpack.c.bf16 %v197, %v196
  %v221 = vpack.c.bf16 %v199, %v198
  %v230 = vunpack.c.l.b16 %v180
  %v231 = vunpack.c.l.b16 %v181
  %v232 = vunpack.c.l.b16 %v182
  %v233 = vunpack.c.l.b16 %v183
  %v234 = vunpack.c.l.b16 %v184
  %v235 = vunpack.c.l.b16 %v185
  %v236 = vunpack.c.l.b16 %v186
  %v237 = vunpack.c.l.b16 %v187
  %v238 = vpack.c.b16 %v231, %v230
  %v239 = vpack.c.b16 %v233, %v232
  %v240 = vpack.c.b16 %v235, %v234
  %v241 = vpack.c.b16 %v237, %v236
  %vm246 = vcmask 523264
  %v248 = vsel %vm246, %v220, 0
  %v251 = vsel %vm246, %v221, 0
  %253 = vmatprep.subr.bf16.mxu0 0
  %254 = vmatpush1.bf16.msra.mxu0 %v238
  %255 = vmatprep.subr.bf16.mxu0 0
  %256 = vmatpush1.bf16.msra.mxu0 %v239
  %257 = vmatprep.subr.bf16.mxu0 0
  %258 = vmatpush1.bf16.msra.mxu0 %v240
  %259 = vmatprep.subr.bf16.mxu0 0
  %260 = vmatpush1.bf16.msra.mxu0 %v241
  %261 = vmatprep.subr.bf16.mxu0 0
  %262 = vmatpush1.bf16.msra.mxu0 0
  %263 = vmatprep.subr.bf16.mxu0 0
  %264 = vmatpush1.bf16.msra.mxu0 0
  %265 = vmatprep.subr.bf16.mxu0 0
  %266 = vmatpush1.bf16.msra.mxu0 0
  %267 = vmatprep.subr.bf16.mxu0 0
  %268 = vmatpush1.bf16.msra.mxu0 0
  %269 = vmatprep.subr.bf16.mxu0 0
  %270 = vmatpush1.bf16.msra.mxu0 0
  %271 = vmatprep.subr.bf16.mxu0 0
  %272 = vmatpush1.bf16.msra.mxu0 0
  %273 = vmatprep.subr.bf16.mxu0 0
  %274 = vmatpush1.bf16.msra.mxu0 0
  %275 = vmatprep.subr.bf16.mxu0 0
  %276 = vmatpush1.bf16.msra.mxu0 0
  %277 = vmatprep.subr.bf16.mxu0 0
  %278 = vmatpush1.bf16.msra.mxu0 0
  %279 = vmatprep.subr.bf16.mxu0 0
  %280 = vmatpush1.bf16.msra.mxu0 0
  %281 = vmatprep.subr.bf16.mxu0 0
  %282 = vmatpush1.bf16.msra.mxu0 0
  %283 = vmatprep.subr.bf16.mxu0 0
  %284 = vmatpush1.bf16.msra.mxu0 0
  %285 = vmatprep.mubr.bf16.mxu0 0
  %286 = vmatmul.mubr.bf16.gmra.mrb[0].mxu0 %v248
  %v287 = vpop.f32.mrb[0].mxu0
  %v288 = vadd.f32 0.0, %v287
  %v289 = vpop.f32.mrb[0].mxu0
  %v290 = vpop.f32.mrb[0].mxu0
  %v291 = vadd.f32 0.0, %v290
  %v292 = vpop.f32.mrb[0].mxu0
  %293 = vmatprep.mubr.bf16.mxu0 0
  %294 = vmatmul.mubr.bf16.gmra.mrb[0].mxu0 %v251
  %v295 = vpop.f32.mrb[0].mxu0
  %v296 = vadd.f32 0.0, %v295
  %v297 = vpop.f32.mrb[0].mxu0
  %v298 = vpop.f32.mrb[0].mxu0
  %v299 = vadd.f32 0.0, %v298
  %v300 = vpop.f32.mrb[0].mxu0
  %301 = vdwg.mxu0
  %v310 = vunpack.c.l.b16 %v172
  %v311 = vunpack.c.l.b16 %v173
  %v312 = vunpack.c.l.b16 %v174
  %v313 = vunpack.c.l.b16 %v175
  %v314 = vunpack.c.l.b16 %v176
  %v315 = vunpack.c.l.b16 %v177
  %v316 = vunpack.c.l.b16 %v178
  %v317 = vunpack.c.l.b16 %v179
  %v318 = vpack.c.b16 %v311, %v310
  %v319 = vpack.c.b16 %v313, %v312
  %v320 = vpack.c.b16 %v315, %v314
  %v321 = vpack.c.b16 %v317, %v316
  %v327 = vsel %vm246, %v218, 0
  %v330 = vsel %vm246, %v219, 0
  %332 = vmatprep.subr.bf16.mxu0 0
  %333 = vmatpush1.bf16.msra.mxu0 %v318
  %334 = vmatprep.subr.bf16.mxu0 0
  %335 = vmatpush1.bf16.msra.mxu0 %v319
  %336 = vmatprep.subr.bf16.mxu0 0
  %337 = vmatpush1.bf16.msra.mxu0 %v320
  %338 = vmatprep.subr.bf16.mxu0 0
  %339 = vmatpush1.bf16.msra.mxu0 %v321
  %340 = vmatprep.subr.bf16.mxu0 0
  %341 = vmatpush1.bf16.msra.mxu0 0
  %342 = vmatprep.subr.bf16.mxu0 0
  %343 = vmatpush1.bf16.msra.mxu0 0
  %344 = vmatprep.subr.bf16.mxu0 0
  %345 = vmatpush1.bf16.msra.mxu0 0
  %346 = vmatprep.subr.bf16.mxu0 0
  %347 = vmatpush1.bf16.msra.mxu0 0
  %348 = vmatprep.subr.bf16.mxu0 0
  %349 = vmatpush1.bf16.msra.mxu0 0
  %350 = vmatprep.subr.bf16.mxu0 0
  %351 = vmatpush1.bf16.msra.mxu0 0
  %352 = vmatprep.subr.bf16.mxu0 0
  %353 = vmatpush1.bf16.msra.mxu0 0
  %354 = vmatprep.subr.bf16.mxu0 0
  %355 = vmatpush1.bf16.msra.mxu0 0
  %356 = vmatprep.subr.bf16.mxu0 0
  %357 = vmatpush1.bf16.msra.mxu0 0
  %358 = vmatprep.subr.bf16.mxu0 0
  %359 = vmatpush1.bf16.msra.mxu0 0
  %360 = vmatprep.subr.bf16.mxu0 0
  %361 = vmatpush1.bf16.msra.mxu0 0
  %362 = vmatprep.subr.bf16.mxu0 0
  %363 = vmatpush1.bf16.msra.mxu0 0
  %364 = vmatprep.mubr.bf16.mxu0 0
  %365 = vmatmul.mubr.bf16.gmra.mrb[0].mxu0 %v327
  %v366 = vpop.f32.mrb[0].mxu0
  %v367 = vadd.f32 %v288, %v366
  %v368 = vpop.f32.mrb[0].mxu0
  %v369 = vpop.f32.mrb[0].mxu0
  %v370 = vadd.f32 %v291, %v369
  %v371 = vpop.f32.mrb[0].mxu0
  %372 = vmatprep.mubr.bf16.mxu0 0
  %373 = vmatmul.mubr.bf16.gmra.mrb[0].mxu0 %v330
  %v374 = vpop.f32.mrb[0].mxu0
  %v375 = vadd.f32 %v296, %v374
  %v376 = vpop.f32.mrb[0].mxu0
  %v377 = vpop.f32.mrb[0].mxu0
  %v378 = vadd.f32 %v299, %v377
  %v379 = vpop.f32.mrb[0].mxu0
  %380 = vdwg.mxu0
  %v381 = vmul.f32 %v367, %v367
  %v382 = vmul.f32 %v370, %v370
  %v383 = vmul.f32 %v375, %v375
  %v384 = vmul.f32 %v378, %v378
  %389 = vrot.lane.b32.xlu0 %v381, 64
  %v390 = vpop.permute.xlu0 %389
  %391 = vrot.lane.b32.xlu0 %v382, 64
  %v392 = vpop.permute.xlu0 %391
  %393 = vrot.lane.b32.xlu0 %v383, 64
  %v394 = vpop.permute.xlu0 %393
  %395 = vrot.lane.b32.xlu0 %v384, 64
  %v396 = vpop.permute.xlu0 %395
  %v401 = vmul.f32 %v390, %v194
  %v402 = vmul.f32 %v392, %v194
  %v403 = vmul.f32 %v394, %v194
  %v404 = vmul.f32 %v396, %v194
  %v405 = vadd.f32 %v381, %v401
  %v406 = vadd.f32 %v382, %v402
  %v407 = vadd.f32 %v383, %v403
  %v408 = vadd.f32 %v384, %v404
  %v409 = vrsqrt.pop %v405
  %v410 = vmul.f32 %v405, %v409
  %vm411 = vcmp.eq.f32.partialorder %v405, inf
  %v412 = vsel %vm411, %v405, %v410
  %vm413 = vcmp.eq.f32.partialorder %v405, 0.0
  %v414 = vand.u32 %v405, 2147483648
  %v415 = vsel %vm413, %v414, %v412
  %v416 = vrsqrt.pop %v406
  %v417 = vmul.f32 %v406, %v416
  %vm418 = vcmp.eq.f32.partialorder %v406, inf
  %v419 = vsel %vm418, %v406, %v417
  %vm420 = vcmp.eq.f32.partialorder %v406, 0.0
  %v421 = vand.u32 %v406, 2147483648
  %v422 = vsel %vm420, %v421, %v419
  %v423 = vrsqrt.pop %v407
  %v424 = vmul.f32 %v407, %v423
  %vm425 = vcmp.eq.f32.partialorder %v407, inf
  %v426 = vsel %vm425, %v407, %v424
  %vm427 = vcmp.eq.f32.partialorder %v407, 0.0
  %v428 = vand.u32 %v407, 2147483648
  %v429 = vsel %vm427, %v428, %v426
  %v430 = vrsqrt.pop %v408
  %v431 = vmul.f32 %v408, %v430
  %vm432 = vcmp.eq.f32.partialorder %v408, inf
  %v433 = vsel %vm432, %v408, %v431
  %vm434 = vcmp.eq.f32.partialorder %v408, 0.0
  %v435 = vand.u32 %v408, 2147483648
  %v436 = vsel %vm434, %v435, %v433
  %v437 = vld [vmem:[%s127] sm:$0xff]
  %v438 = vld [vmem:[%s127 + $0x8] sm:$0xff]
  %v439 = vld [vmem:[%s127 + $0x10] sm:$0xff]
  %v440 = vld [vmem:[%s127 + $0x18] sm:$0xff]
  %v441 = vld [vmem:[%s152 + $0x7] sm:$0x1]
  %v446 = vrot.slane %v437, 7
  %v447 = vrot.slane %v438, 7
  %v448 = vsel %vm205, %v446, %v447
  %v449 = vrot.slane %v439, 7
  %v450 = vsel %vm205, %v447, %v449
  %v451 = vrot.slane %v440, 7
  %v452 = vsel %vm205, %v449, %v451
  %v457 = vsel %vm205, %v441, %v446
  %v458 = vpack.c.bf16 %v448, %v457
  %v459 = vpack.c.bf16 %v452, %v450
  %v460 = vpack.c.bf16 %v438, %v437
  %v461 = vpack.c.bf16 %v440, %v439
  %v463 = vsel %vm246, %v460, 0
  %v466 = vsel %vm246, %v461, 0
  %468 = vmatprep.subr.bf16.mxu0 0
  %469 = vmatpush1.bf16.msra.mxu0 %v238
  %470 = vmatprep.subr.bf16.mxu0 0
  %471 = vmatpush1.bf16.msra.mxu0 %v239
  %472 = vmatprep.subr.bf16.mxu0 0
  %473 = vmatpush1.bf16.msra.mxu0 %v240
  %474 = vmatprep.subr.bf16.mxu0 0
  %475 = vmatpush1.bf16.msra.mxu0 %v241
  %476 = vmatprep.subr.bf16.mxu0 0
  %477 = vmatpush1.bf16.msra.mxu0 0
  %478 = vmatprep.subr.bf16.mxu0 0
  %479 = vmatpush1.bf16.msra.mxu0 0
  %480 = vmatprep.subr.bf16.mxu0 0
  %481 = vmatpush1.bf16.msra.mxu0 0
  %482 = vmatprep.subr.bf16.mxu0 0
  %483 = vmatpush1.bf16.msra.mxu0 0
  %484 = vmatprep.subr.bf16.mxu0 0
  %485 = vmatpush1.bf16.msra.mxu0 0
  %486 = vmatprep.subr.bf16.mxu0 0
  %487 = vmatpush1.bf16.msra.mxu0 0
  %488 = vmatprep.subr.bf16.mxu0 0
  %489 = vmatpush1.bf16.msra.mxu0 0
  %490 = vmatprep.subr.bf16.mxu0 0
  %491 = vmatpush1.bf16.msra.mxu0 0
  %492 = vmatprep.subr.bf16.mxu0 0
  %493 = vmatpush1.bf16.msra.mxu0 0
  %494 = vmatprep.subr.bf16.mxu0 0
  %495 = vmatpush1.bf16.msra.mxu0 0
  %496 = vmatprep.subr.bf16.mxu0 0
  %497 = vmatpush1.bf16.msra.mxu0 0
  %498 = vmatprep.subr.bf16.mxu0 0
  %499 = vmatpush1.bf16.msra.mxu0 0
  %500 = vmatprep.mubr.bf16.mxu0 0
  %501 = vmatmul.mubr.bf16.gmra.mrb[0].mxu0 %v463
  %v502 = vpop.f32.mrb[0].mxu0
  %v503 = vadd.f32 0.0, %v502
  %v504 = vpop.f32.mrb[0].mxu0
  %v505 = vpop.f32.mrb[0].mxu0
  %v506 = vadd.f32 0.0, %v505
  %v507 = vpop.f32.mrb[0].mxu0
  %508 = vmatprep.mubr.bf16.mxu0 0
  %509 = vmatmul.mubr.bf16.gmra.mrb[0].mxu0 %v466
  %v510 = vpop.f32.mrb[0].mxu0
  %v511 = vadd.f32 0.0, %v510
  %v512 = vpop.f32.mrb[0].mxu0
  %v513 = vpop.f32.mrb[0].mxu0
  %v514 = vadd.f32 0.0, %v513
  %v515 = vpop.f32.mrb[0].mxu0
  %516 = vdwg.mxu0
  %v518 = vsel %vm246, %v458, 0
  %v521 = vsel %vm246, %v459, 0
  %523 = vmatprep.subr.bf16.mxu0 0
  %524 = vmatpush1.bf16.msra.mxu0 %v318
  %525 = vmatprep.subr.bf16.mxu0 0
  %526 = vmatpush1.bf16.msra.mxu0 %v319
  %527 = vmatprep.subr.bf16.mxu0 0
  %528 = vmatpush1.bf16.msra.mxu0 %v320
  %529 = vmatprep.subr.bf16.mxu0 0
  %530 = vmatpush1.bf16.msra.mxu0 %v321
  %531 = vmatprep.subr.bf16.mxu0 0
  %532 = vmatpush1.bf16.msra.mxu0 0
  %533 = vmatprep.subr.bf16.mxu0 0
  %534 = vmatpush1.bf16.msra.mxu0 0
  %535 = vmatprep.subr.bf16.mxu0 0
  %536 = vmatpush1.bf16.msra.mxu0 0
  %537 = vmatprep.subr.bf16.mxu0 0
  %538 = vmatpush1.bf16.msra.mxu0 0
  %539 = vmatprep.subr.bf16.mxu0 0
  %540 = vmatpush1.bf16.msra.mxu0 0
  %541 = vmatprep.subr.bf16.mxu0 0
  %542 = vmatpush1.bf16.msra.mxu0 0
  %543 = vmatprep.subr.bf16.mxu0 0
  %544 = vmatpush1.bf16.msra.mxu0 0
  %545 = vmatprep.subr.bf16.mxu0 0
  %546 = vmatpush1.bf16.msra.mxu0 0
  %547 = vmatprep.subr.bf16.mxu0 0
  %548 = vmatpush1.bf16.msra.mxu0 0
  %549 = vmatprep.subr.bf16.mxu0 0
  %550 = vmatpush1.bf16.msra.mxu0 0
  %551 = vmatprep.subr.bf16.mxu0 0
  %552 = vmatpush1.bf16.msra.mxu0 0
  %553 = vmatprep.subr.bf16.mxu0 0
  %554 = vmatpush1.bf16.msra.mxu0 0
  %555 = vmatprep.mubr.bf16.mxu0 0
  %556 = vmatmul.mubr.bf16.gmra.mrb[0].mxu0 %v518
  %v557 = vpop.f32.mrb[0].mxu0
  %v558 = vadd.f32 %v503, %v557
  %v559 = vpop.f32.mrb[0].mxu0
  %v560 = vpop.f32.mrb[0].mxu0
  %v561 = vadd.f32 %v506, %v560
  %v562 = vpop.f32.mrb[0].mxu0
  %563 = vmatprep.mubr.bf16.mxu0 0
  %564 = vmatmul.mubr.bf16.gmra.mrb[0].mxu0 %v521
  %v565 = vpop.f32.mrb[0].mxu0
  %v566 = vadd.f32 %v511, %v565
  %v567 = vpop.f32.mrb[0].mxu0
  %v568 = vpop.f32.mrb[0].mxu0
  %v569 = vadd.f32 %v514, %v568
  %v570 = vpop.f32.mrb[0].mxu0
  %571 = vdwg.mxu0
  %v572 = vmul.f32 %v558, %v558
  %v573 = vmul.f32 %v561, %v561
  %v574 = vmul.f32 %v566, %v566
  %v575 = vmul.f32 %v569, %v569
  %580 = vrot.lane.b32.xlu0 %v572, 64
  %v581 = vpop.permute.xlu0 %580
  %582 = vrot.lane.b32.xlu0 %v573, 64
  %v583 = vpop.permute.xlu0 %582
  %584 = vrot.lane.b32.xlu0 %v574, 64
  %v585 = vpop.permute.xlu0 %584
  %586 = vrot.lane.b32.xlu0 %v575, 64
  %v587 = vpop.permute.xlu0 %586
  %v592 = vmul.f32 %v581, %v194
  %v593 = vmul.f32 %v583, %v194
  %v594 = vmul.f32 %v585, %v194
  %v595 = vmul.f32 %v587, %v194
  %v596 = vadd.f32 %v572, %v592
  %v597 = vadd.f32 %v573, %v593
  %v598 = vadd.f32 %v574, %v594
  %v599 = vadd.f32 %v575, %v595
  %v600 = vrsqrt.pop %v596
  %v601 = vmul.f32 %v596, %v600
  %vm602 = vcmp.eq.f32.partialorder %v596, inf
  %v603 = vsel %vm602, %v596, %v601
  %vm604 = vcmp.eq.f32.partialorder %v596, 0.0
  %v605 = vand.u32 %v596, 2147483648
  %v606 = vsel %vm604, %v605, %v603
  %v607 = vrsqrt.pop %v597
  %v608 = vmul.f32 %v597, %v607
  %vm609 = vcmp.eq.f32.partialorder %v597, inf
  %v610 = vsel %vm609, %v597, %v608
  %vm611 = vcmp.eq.f32.partialorder %v597, 0.0
  %v612 = vand.u32 %v597, 2147483648
  %v613 = vsel %vm611, %v612, %v610
  %v614 = vrsqrt.pop %v598
  %v615 = vmul.f32 %v598, %v614
  %vm616 = vcmp.eq.f32.partialorder %v598, inf
  %v617 = vsel %vm616, %v598, %v615
  %vm618 = vcmp.eq.f32.partialorder %v598, 0.0
  %v619 = vand.u32 %v598, 2147483648
  %v620 = vsel %vm618, %v619, %v617
  %v621 = vrsqrt.pop %v599
  %v622 = vmul.f32 %v599, %v621
  %vm623 = vcmp.eq.f32.partialorder %v599, inf
  %v624 = vsel %vm623, %v599, %v622
  %vm625 = vcmp.eq.f32.partialorder %v599, 0.0
  %v626 = vand.u32 %v599, 2147483648
  %v627 = vsel %vm625, %v626, %v624
  %v628 = vsub.f32 %v415, %v606
  %v629 = vsub.f32 %v422, %v613
  %v630 = vsub.f32 %v429, %v620
  %v631 = vsub.f32 %v436, %v627
  %v632 = vand.u32 2147483647, %v628
  %v633 = vand.u32 2147483647, %v629
  %v634 = vand.u32 2147483647, %v630
  %v635 = vand.u32 2147483647, %v631
  %v636 = vld [vmem:[%s163] sm:$0xff]
  %v637 = vld [vmem:[%s163 + $0x8] sm:$0xff]
  %v638 = vld [vmem:[%s163 + $0x10] sm:$0xff]
  %v639 = vld [vmem:[%s163 + $0x18] sm:$0xff]
  %vm640 = vcmp.gt.f32.partialorder %v636, 0.5
  %vm641 = vcmp.gt.f32.partialorder %v637, 0.5
  %vm642 = vcmp.gt.f32.partialorder %v638, 0.5
  %vm643 = vcmp.gt.f32.partialorder %v639, 0.5
  %v644 = vsel %vm640, 1, 0
  %v645 = vsel %vm641, 1, 0
  %v646 = vsel %vm642, 1, 0
  %v647 = vsel %vm643, 1, 0
  %648 = vset.pattern.permute.xlu0 0
  %649 = vperm.xlu0 %648, %v644
  %v650 = vpop.permute.xlu0 %649
  %651 = vset.pattern.permute.xlu0 0
  %652 = vperm.xlu0 %651, %v645
  %v653 = vpop.permute.xlu0 %652
  %654 = vset.pattern.permute.xlu0 0
  %655 = vperm.xlu0 %654, %v646
  %v656 = vpop.permute.xlu0 %655
  %657 = vset.pattern.permute.xlu0 0
  %658 = vperm.xlu0 %657, %v647
  %v659 = vpop.permute.xlu0 %658
  %vm660 = vcmp.eq.s32.totalorder %v650, 1
  %vm661 = vcmp.eq.s32.totalorder %v653, 1
  %vm662 = vcmp.eq.s32.totalorder %v656, 1
  %vm663 = vcmp.eq.s32.totalorder %v659, 1
  %v664 = vsel %vm195, 1, 0
  %vm665 = vcmp.eq.s32.totalorder %v664, 1
  %vm666 = vmand %vm660, %vm665
  %vm667 = vmand %vm661, %vm665
  %vm668 = vmand %vm662, %vm665
  %vm669 = vmand %vm663, %vm665
  %v670 = vsel %vm666, %v632, 0.0
  %v671 = vsel %vm667, %v633, 0.0
  %v672 = vsel %vm668, %v634, 0.0
  %v673 = vsel %vm669, %v635, 0.0
  %v674 = vld [vmem:[%s7] sm:$0xff]
  %v675 = vadd.f32 %v670, %v671
  %v676 = vadd.f32 %v675, %v672
  %v677 = vadd.f32 %v676, %v673
  %v678 = vadd.f32 %v674, %v677
  %679 = vst [vmem:[%s7] sm:$0xff] %v678
  // Predicated region
  $region34: #{l1_freq_loss.1} parent=0 // pred_check
    _
  $region35: #{l1_freq_loss.1} parent=0 // pred_check_branch
    %681 = sbr.rel (0) target = $region37
  $region36: #{l1_freq_loss.1} parent=0 // pred_region
    _
  $region37: #{l1_freq_loss.1} parent=0 // pred_fallthru
    _
  // Predicated region
  $region38: #{l1_freq_loss.1} parent=0 // pred_check
    _
  $region39: #{l1_freq_loss.1} parent=0 // pred_check_branch
    %683 = sbr.rel (0) target = $region41
  $region40: #{l1_freq_loss.1} parent=0 // pred_region
    _
  $region41: #{l1_freq_loss.1} parent=0 // pred_fallthru
    _

</llo_original>
